<compile_context>
chip_gen: v7x
topology: tpu7x:2x2x1
jax: 0.10.0
libtpu: 0.0.40
codegen_flags: <defaults>
</compile_context>

<pallas_src>
import functools

import jax
import jax.numpy as jnp
from jax.experimental import pallas as pl
from jax.experimental.pallas import tpu as pltpu


PACK = 2  # pack 2 pixel rows (64 ch each) into one 128-lane-dense row


def _conv1x1_kernel(x_ref, w_ref, b_ref, o_ref):
    # x_ref: (bm, PACK*C_in)      -- 128 lanes, unmasked loads
    # w_ref: (PACK*C_in, PACK*C_out) block-diagonal weight (resident)
    # b_ref: (1, PACK*C_out)
    # o_ref: (bm, PACK*C_out)     -- 128 lanes, unmasked stores
    acc = jnp.dot(x_ref[...], w_ref[...], preferred_element_type=jnp.float32)
    o_ref[...] = (acc + b_ref[...]).astype(o_ref.dtype)


@functools.partial(jax.jit, static_argnames=("padding",))
def conv1x1_pallas(x_nchw, weight, bias, *, padding=1):
    """1x1 conv, stride 1, zero padding.  x_nchw: (N, C_in, H, W),
    weight: (C_out, C_in, 1, 1), bias: (C_out,).
    Returns (N, C_out, H + 2*padding, W + 2*padding), matching torch Conv2d."""
    N, C_in, H, W = x_nchw.shape
    C_out = weight.shape[0]
    Hp, Wp = H + 2 * padding, W + 2 * padding

    # Interior pixels only: NCHW -> NHWC -> (M, C_in) rows.
    M = N * H * W
    x_rows = jnp.transpose(x_nchw, (0, 2, 3, 1)).reshape(M, C_in)

    # Lane-dense packing: view PACK consecutive rows as one 128-lane row.
    M_pack = pl.cdiv(M, PACK)
    x_rows = jnp.pad(x_rows, ((0, M_pack * PACK - M), (0, 0)))
    x_pack = x_rows.reshape(M_pack, PACK * C_in)

    w_mat = weight.reshape(C_out, C_in).T.astype(jnp.float32)         # (C_in, C_out)
    w_big = jnp.kron(jnp.eye(PACK, dtype=jnp.float32), w_mat)         # (128, 128) block-diag
    b_big = jnp.tile(bias.astype(jnp.float32).reshape(1, C_out), (1, PACK))  # (1, 128)

    # Two large parallel blocks (v7x megacore); pad rows up to 2 * bm.
    n_blocks = 2
    bm = pl.cdiv(pl.cdiv(M_pack, n_blocks), 8) * 8
    Mp = bm * n_blocks
    x_pack = jnp.pad(x_pack, ((0, Mp - M_pack), (0, 0)))

    out_pack = pl.pallas_call(
        _conv1x1_kernel,
        out_shape=jax.ShapeDtypeStruct((Mp, PACK * C_out), jnp.float32),
        grid_spec=pl.GridSpec(
            grid=(n_blocks,),
            in_specs=[
                pl.BlockSpec((bm, PACK * C_in), lambda i: (i, 0)),
                pl.BlockSpec((PACK * C_in, PACK * C_out), lambda i: (0, 0)),
                pl.BlockSpec((1, PACK * C_out), lambda i: (0, 0)),
            ],
            out_specs=pl.BlockSpec((bm, PACK * C_out), lambda i: (i, 0)),
        ),
        compiler_params=pltpu.CompilerParams(
            dimension_semantics=("parallel",)),
    )(x_pack, w_big, b_big)

    # Unpack back to per-pixel rows and drop padding rows.
    out_rows = out_pack.reshape(Mp * PACK, C_out)[:M]
    out_nhwc = out_rows.reshape(N, H, W, C_out)

    # Zero-padded border of a 1x1 conv is exactly the bias: fill, then write
    # the interior.  Fuses under jit; no padded rows ever hit the MXU.
    full = jnp.broadcast_to(
        bias.astype(jnp.float32).reshape(1, 1, 1, C_out), (N, Hp, Wp, C_out))
    full = jax.lax.dynamic_update_slice(full, out_nhwc, (0, padding, padding, 0))
    return jnp.transpose(full, (0, 3, 1, 2))  # back to NCHW


if __name__ == "__main__":
    key = jax.random.PRNGKey(0)
    k_x, k_w, k_b = jax.random.split(key, 3)

    N, C_in, H, W = 2, 64, 16, 16
    C_out, ksize, stride, padding = 64, 1, 1, 1

    # Deterministic parameter init (kaiming-uniform-like bounds, as in torch).
    fan_in = C_in * ksize * ksize
    bound = 1.0 / (fan_in ** 0.5)
    x = jax.random.normal(k_x, (N, C_in, H, W), dtype=jnp.float32)
    weight = jax.random.uniform(k_w, (C_out, C_in, ksize, ksize),
                                minval=-bound, maxval=bound, dtype=jnp.float32)
    bias = jax.random.uniform(k_b, (C_out,), minval=-bound, maxval=bound,
                              dtype=jnp.float32)

    out = conv1x1_pallas(x, weight, bias, padding=padding)
    out = jax.block_until_ready(out)

    # Reference check in plain JAX (lax conv), same semantics as torch Conv2d.
    ref = jax.lax.conv_general_dilated(
        x, weight, window_strides=(stride, stride),
        padding=((padding, padding), (padding, padding)),
        dimension_numbers=("NCHW", "OIHW", "NCHW"),
    ) + bias.reshape(1, C_out, 1, 1)
    assert out.shape == (N, C_out, H + 2 * padding, W + 2 * padding)
    assert jnp.allclose(out, ref, atol=1e-4, rtol=1e-4)

    print("KERNEL_OK")
</pallas_src>

<mosaic_0001>
module attributes {stable_mosaic.version = 11 : i64} {
  func.func @_conv1x1_kernel(%arg0: i32, %arg1: memref<128x128xf32, #tpu.memory_space<vmem>>, %arg2: memref<128x128xf32, #tpu.memory_space<vmem>>, %arg3: memref<1x128xf32, #tpu.memory_space<vmem>>, %arg4: memref<128x128xf32, #tpu.memory_space<vmem>>) attributes {dimension_semantics = [#tpu.dimension_semantics<parallel>], iteration_bounds = array<i64: 2>, scalar_prefetch = 0 : i64, scratch_operands = 0 : i64, tpu.core_type = #tpu.core_type<tc>, window_params = [{transform_indices = @transform_0, window_bounds = array<i64: 128, 128>}, {pipeline_mode = #tpu.pipeline_mode<synchronous>, transform_indices = @transform_1, window_bounds = array<i64: 128, 128>}, {pipeline_mode = #tpu.pipeline_mode<synchronous>, transform_indices = @transform_2, window_bounds = array<i64: 1, 128>}, {transform_indices = @transform_3, window_bounds = array<i64: 128, 128>}]} {
    %c0 = arith.constant 0 : index
    %c0_0 = arith.constant 0 : index
    %0 = vector.load %arg1[%c0, %c0_0] : memref<128x128xf32, #tpu.memory_space<vmem>>, vector<128x128xf32>
    %c0_1 = arith.constant 0 : index
    %c0_2 = arith.constant 0 : index
    %1 = vector.load %arg2[%c0_1, %c0_2] : memref<128x128xf32, #tpu.memory_space<vmem>>, vector<128x128xf32>
    %cst = arith.constant dense<0.000000e+00> : vector<128x128xf32>
    %2 = tpu.matmul %0, %1, %cst {dimension_numbers = #tpu.dot_dimension_numbers<[1], [0], [0], [1], [0, 0, 1, 1], [], []>} : vector<128x128xf32>, vector<128x128xf32>, vector<128x128xf32> -> vector<128x128xf32>
    %c0_3 = arith.constant 0 : index
    %c0_4 = arith.constant 0 : index
    %3 = vector.load %arg3[%c0_3, %c0_4] : memref<1x128xf32, #tpu.memory_space<vmem>>, vector<1x128xf32>
    %4 = vector.broadcast %3 : vector<1x128xf32> to vector<128x128xf32>
    %5 = arith.addf %2, %4 : vector<128x128xf32>
    %c0_5 = arith.constant 0 : index
    %c0_6 = arith.constant 0 : index
    %6 = vector.load %arg4[%c0_5, %c0_6] : memref<128x128xf32, #tpu.memory_space<vmem>>, vector<128x128xf32>
    tpu.vector_store %arg4[%c0_5, %c0_6], %5 {strides = array<i32>} : memref<128x128xf32, #tpu.memory_space<vmem>>, vector<128x128xf32>,
    return
  }
  func.func @transform_0(%arg0: i32) -> (i32, i32) {
    %c0_i32 = arith.constant 0 : i32
    %c0_i32_0 = arith.constant 0 : i32
    return %arg0, %c0_i32 : i32, i32
  }
  func.func @transform_1(%arg0: i32) -> (i32, i32) {
    %c0_i32 = arith.constant 0 : i32
    %c0_i32_0 = arith.constant 0 : i32
    %c0_i32_1 = arith.constant 0 : i32
    return %c0_i32, %c0_i32_0 : i32, i32
  }
  func.func @transform_2(%arg0: i32) -> (i32, i32) {
    %c0_i32 = arith.constant 0 : i32
    %c0_i32_0 = arith.constant 0 : i32
    %c0_i32_1 = arith.constant 0 : i32
    return %c0_i32, %c0_i32_0 : i32, i32
  }
  func.func @transform_3(%arg0: i32) -> (i32, i32) {
    %c0_i32 = arith.constant 0 : i32
    %c0_i32_0 = arith.constant 0 : i32
    return %arg0, %c0_i32 : i32, i32
  }
}

</mosaic_0001>

<llo_original>
// kernel: conv1x1_pallas.1
$region0: #{conv1x1_pallas.1}
  #allocation0 [shape = 'u32[]', space=smem, size = 0x4, offset = 0x4, fixed_abs, tag = 'smem constant byte address 0x4 - core index']
  #allocation1 [shape = 'u32[144,128]{1,0:T(1,128)}', space=vmem, size = 0x12000, scoped, tag = 'internal scratch']
  %s0 = inlined_call_operand.vmem [shape: f32[256,128], index: 0, kind: input, shape index: {}]
  %s1 = inlined_call_operand.vmem [shape: f32[128,128], index: 1, kind: input, shape index: {}]
  %s2 = inlined_call_operand.vmem [shape: f32[1,128], index: 2, kind: input, shape index: {}]
  %s3 = inlined_call_operand.vmem [shape: f32[256,128], index: 3, kind: output, shape index: {}]
  %s4 = sld [smem:[#allocation0]]
  $region45: #{conv1x1_pallas.1} parent=0
    _
  %s6 = ssub.s32 1, %s4
  %s7 = scalar_select 0, %s6, %s4
  loop: start=0, step=1, limit=4
  $region2: #{conv1x1_pallas.1} parent=0 // loop_pre_header
    _
  $region3: #{conv1x1_pallas.1} parent=0 // loop_header
    %s9 = sphi 0, %s13
    %p10 = scmp.ge.s32.totalorder %s9, 4
    %s19 = sphi 0, %s21
    %s22 = sphi 0, %s19
    %s23 = sphi 0, %s22
    %s39 = sphi 0, %s23
    %s43 = sphi 0, %s43
    %s45 = sphi 0, %s43
    %s46 = sphi 0, %s45
    %s60 = sphi 0, %s46
    %s64 = sphi 0, %s64
    %s66 = sphi 0, %s64
    %s67 = sphi 0, %s66
    %s81 = sphi 0, %s67
    %s87 = sphi 0, %s89
    %s90 = sphi 0, %s87
    %s91 = sphi 0, %s90
    %s107 = sphi 0, %s91
  $region4: #{conv1x1_pallas.1} parent=0 // loop_header_branch
    %12 = sbr.rel (%p10) target = $region8
  $region5: #{conv1x1_pallas.1} parent=0 // loop_body
    %s14 = ssub.s32 %s9, 1
    %s15 = ssub.s32 %s9, 2
    %s16 = sadd.s32 %s9, 1
    %s17 = ssub.s32 %s9, %s16
    %p18 = scmp.eq.s32.totalorder %s17, 0
    %s20 = sadd.s32 %s19, 1
    %s21 = scalar_select %p18, %s19, %s20
    %p24 = pneg %p18
    %p25 = scmp.eq.s32.totalorder %s9, 1
    %p26 = por %p24, %p25
    %p27 = scmp.ne.s32.totalorder %s19, %s22
    %p28 = scmp.eq.s32.totalorder %s9, 0
    %p29 = por %p27, %p28
    %p30 = scmp.ne.s32.totalorder %s19, %s22
    %p31 = scmp.eq.s32.totalorder %s14, 1
    %p32 = por %p30, %p31
    %p33 = scmp.ne.s32.totalorder %s22, %s23
    %p34 = scmp.eq.s32.totalorder %s14, 0
    %p35 = por %p33, %p34
    %p36 = scmp.ne.s32.totalorder %s22, %s23
    %p37 = scmp.eq.s32.totalorder %s15, 1
    %p38 = por %p36, %p37
    %p40 = scmp.ne.s32.totalorder %s23, %s39
    %p41 = scmp.eq.s32.totalorder %s15, 0
    %p42 = por %p40, %p41
    %s44 = sadd.s32 %s43, 1
    %p47 = scmp.eq.s32.totalorder %s9, 1
    %p48 = scmp.ne.s32.totalorder %s43, %s45
    %p49 = scmp.eq.s32.totalorder %s9, 0
    %p50 = por %p48, %p49
    %p51 = scmp.ne.s32.totalorder %s43, %s45
    %p52 = scmp.eq.s32.totalorder %s14, 1
    %p53 = por %p51, %p52
    %p54 = scmp.ne.s32.totalorder %s45, %s46
    %p55 = scmp.eq.s32.totalorder %s14, 0
    %p56 = por %p54, %p55
    %p57 = scmp.ne.s32.totalorder %s45, %s46
    %p58 = scmp.eq.s32.totalorder %s15, 1
    %p59 = por %p57, %p58
    %p61 = scmp.ne.s32.totalorder %s46, %s60
    %p62 = scmp.eq.s32.totalorder %s15, 0
    %p63 = por %p61, %p62
    %s65 = sadd.s32 %s64, 1
    %p68 = scmp.eq.s32.totalorder %s9, 1
    %p69 = scmp.ne.s32.totalorder %s64, %s66
    %p70 = scmp.eq.s32.totalorder %s9, 0
    %p71 = por %p69, %p70
    %p72 = scmp.ne.s32.totalorder %s64, %s66
    %p73 = scmp.eq.s32.totalorder %s14, 1
    %p74 = por %p72, %p73
    %p75 = scmp.ne.s32.totalorder %s66, %s67
    %p76 = scmp.eq.s32.totalorder %s14, 0
    %p77 = por %p75, %p76
    %p78 = scmp.ne.s32.totalorder %s66, %s67
    %p79 = scmp.eq.s32.totalorder %s15, 1
    %p80 = por %p78, %p79
    %p82 = scmp.ne.s32.totalorder %s67, %s81
    %p83 = scmp.eq.s32.totalorder %s15, 0
    %p84 = por %p82, %p83
    %s85 = ssub.s32 %s9, %s16
    %p86 = scmp.eq.s32.totalorder %s85, 0
    %s88 = sadd.s32 %s87, 1
    %s89 = scalar_select %p86, %s87, %s88
    %p92 = pneg %p86
    %p93 = scmp.eq.s32.totalorder %s9, 1
    %p94 = por %p92, %p93
    %p95 = scmp.ne.s32.totalorder %s87, %s90
    %p96 = scmp.eq.s32.totalorder %s9, 0
    %p97 = por %p95, %p96
    %p98 = scmp.ne.s32.totalorder %s87, %s90
    %p99 = scmp.eq.s32.totalorder %s14, 1
    %p100 = por %p98, %p99
    %p101 = scmp.ne.s32.totalorder %s90, %s91
    %p102 = scmp.eq.s32.totalorder %s14, 0
    %p103 = por %p101, %p102
    %p104 = scmp.ne.s32.totalorder %s90, %s91
    %p105 = scmp.eq.s32.totalorder %s15, 1
    %p106 = por %p104, %p105
    %p108 = scmp.ne.s32.totalorder %s91, %s107
    %p109 = scmp.eq.s32.totalorder %s15, 0
    %p110 = por %p108, %p109
    %p111 = scmp.le.s32.totalorder 1, %s9
    %p112 = scmp.lt.s32.totalorder %s9, 3
    %p113 = pnand %p111, %p112
    %p114 = pneg %p113
    // Predicated region
    $region9: #{conv1x1_pallas.1} parent=5 // pred_check
      _
    $region10: #{conv1x1_pallas.1} parent=5 // pred_check_branch
      %116 = sbr.rel (%p113) target = $region12
    $region11: #{conv1x1_pallas.1} parent=5 // pred_region
      %s117 = ssub.s32 %s9, 1
      // Predicated region
      $region13: #{conv1x1_pallas.1} parent=11 // pred_check
        %p118 = pneg %p56
      $region14: #{conv1x1_pallas.1} parent=11 // pred_check_branch
        %120 = sbr.rel (%p118) target = $region16
      $region15: #{conv1x1_pallas.1} parent=11 // pred_region
        _
      $region16: #{conv1x1_pallas.1} parent=11 // pred_fallthru
        _
      // Predicated region
      $region17: #{conv1x1_pallas.1} parent=11 // pred_check
        %p121 = pneg %p77
      $region18: #{conv1x1_pallas.1} parent=11 // pred_check_branch
        %123 = sbr.rel (%p121) target = $region20
      $region19: #{conv1x1_pallas.1} parent=11 // pred_region
        _
      $region20: #{conv1x1_pallas.1} parent=11 // pred_fallthru
        _
    $region12: #{conv1x1_pallas.1} parent=5 // pred_fallthru
      _
    %p124 = scmp.lt.s32.totalorder %s9, 2
    // Predicated region
    $region21: #{conv1x1_pallas.1} parent=5 // pred_check
      %p125 = pneg %p124
    $region22: #{conv1x1_pallas.1} parent=5 // pred_check_branch
      %127 = sbr.rel (%p125) target = $region24
    $region23: #{conv1x1_pallas.1} parent=5 // pred_region
      // Predicated region
      $region25: #{conv1x1_pallas.1} parent=23 // pred_check
        %p128 = pneg %p29
      $region26: #{conv1x1_pallas.1} parent=23 // pred_check_branch
        %130 = sbr.rel (%p128) target = $region28
      $region27: #{conv1x1_pallas.1} parent=23 // pred_region
        %s131 = smul.u32 16, %s9
        %p132 = scmp.lt.s32.totalorder %s131, 31
        %s133 = scalar_select %p132, %s131, 31
        %s134 = smul.addr %s133, 8
        %s135 = scalar_lea.vmem %s0, %s134
        %s136 = smul.u32 16, %s9
      $region28: #{conv1x1_pallas.1} parent=23 // pred_fallthru
        _
    $region24: #{conv1x1_pallas.1} parent=5 // pred_fallthru
      _
    %p137 = scmp.le.s32.totalorder 1, %s9
    %p138 = scmp.lt.s32.totalorder %s9, 3
    %p139 = pnand %p137, %p138
    %p140 = pneg %p139
    // Predicated region
    $region29: #{conv1x1_pallas.1} parent=5 // pred_check
      _
    $region30: #{conv1x1_pallas.1} parent=5 // pred_check_branch
      %142 = sbr.rel (%p139) target = $region32
    $region31: #{conv1x1_pallas.1} parent=5 // pred_region
      %s143 = ssub.s32 %s9, 1
      %s144 = smul.u32 16, %s14
      %p145 = scmp.lt.s32.totalorder %s144, 31
      %s146 = scalar_select %p145, %s144, 31
      %s147 = smul.addr %s146, 8
      %s148 = scalar_lea.vmem %s0, %s147
      %p149 = pneg %p35
      %p150 = pneg %p32
      %p151 = pneg %p56
      %p152 = pneg %p53
      %p153 = pneg %p77
      %p154 = pneg %p74
      %p155 = pneg %p103
      %p156 = pneg %p100
      %s157 = smul.u32 16, %s14
      %p158 = scmp.lt.s32.totalorder %s157, 31
      %s159 = scalar_select %p158, %s157, 31
      %s160 = smul.addr %s159, 8
      %s161 = scalar_lea.vmem %s3, %s160
      %s162 = smul.u32 16, %s14
      %p163 = scmp.lt.s32.totalorder %s162, 31
      %s164 = scalar_select %p163, %s162, 31
      %s165 = smul.addr %s164, 8
      %s166 = scalar_lea.vmem %s0, %s165
      %s167 = smul.u32 16, %s14
      %s168 = smul.u32 16, %s14
      %p169 = scmp.lt.s32.totalorder %s168, 31
      %s170 = scalar_select %p169, %s168, 31
      %s171 = smul.addr %s170, 8
      %s172 = scalar_lea.vmem %s3, %s171
      %s173 = smul.u32 16, %s14
      %v174 = vld [vmem:[%s166] sm:$0xff]
      %v175 = vld [vmem:[%s166 + $0x8] sm:$0xff]
      %v176 = vld [vmem:[%s166 + $0x10] sm:$0xff]
      %v177 = vld [vmem:[%s166 + $0x18] sm:$0xff]
      %v178 = vld [vmem:[%s166 + $0x20] sm:$0xff]
      %v179 = vld [vmem:[%s166 + $0x28] sm:$0xff]
      %v180 = vld [vmem:[%s166 + $0x30] sm:$0xff]
      %v181 = vld [vmem:[%s166 + $0x38] sm:$0xff]
      %v182 = vld [vmem:[%s166 + $0x40] sm:$0xff]
      %v183 = vld [vmem:[%s166 + $0x48] sm:$0xff]
      %v184 = vld [vmem:[%s166 + $0x50] sm:$0xff]
      %v185 = vld [vmem:[%s166 + $0x58] sm:$0xff]
      %v186 = vld [vmem:[%s166 + $0x60] sm:$0xff]
      %v187 = vld [vmem:[%s166 + $0x68] sm:$0xff]
      %v188 = vld [vmem:[%s166 + $0x70] sm:$0xff]
      %v189 = vld [vmem:[%s166 + $0x78] sm:$0xff]
      %v190 = vld [vmem:[%s1] sm:$0xff]
      %v191 = vld [vmem:[%s1 + $0x8] sm:$0xff]
      %v192 = vld [vmem:[%s1 + $0x10] sm:$0xff]
      %v193 = vld [vmem:[%s1 + $0x18] sm:$0xff]
      %v194 = vld [vmem:[%s1 + $0x20] sm:$0xff]
      %v195 = vld [vmem:[%s1 + $0x28] sm:$0xff]
      %v196 = vld [vmem:[%s1 + $0x30] sm:$0xff]
      %v197 = vld [vmem:[%s1 + $0x38] sm:$0xff]
      %v198 = vld [vmem:[%s1 + $0x40] sm:$0xff]
      %v199 = vld [vmem:[%s1 + $0x48] sm:$0xff]
      %v200 = vld [vmem:[%s1 + $0x50] sm:$0xff]
      %v201 = vld [vmem:[%s1 + $0x58] sm:$0xff]
      %v202 = vld [vmem:[%s1 + $0x60] sm:$0xff]
      %v203 = vld [vmem:[%s1 + $0x68] sm:$0xff]
      %v204 = vld [vmem:[%s1 + $0x70] sm:$0xff]
      %v205 = vld [vmem:[%s1 + $0x78] sm:$0xff]
      %v206 = vld [vmem:[%s2] sm:$0x1]
      %v208 = vlaneseq
      %v209 = vshrl.u32 %v208, 7
      %v210 = vsub.s32 0, %v209
      %v211 = vrot.slane %v206, %v210
      %213 = vmatprep.subr.mxu0 0.0
      %214 = vmatpush1.msra.mxu0 %v190
      %215 = vmatprep.subr.mxu0 0.0
      %216 = vmatpush1.msra.mxu0 %v191
      %217 = vmatprep.subr.mxu0 0.0
      %218 = vmatpush1.msra.mxu0 %v192
      %219 = vmatprep.subr.mxu0 0.0
      %220 = vmatpush1.msra.mxu0 %v193
      %221 = vmatprep.subr.mxu0 0.0
      %222 = vmatpush1.msra.mxu0 %v194
      %223 = vmatprep.subr.mxu0 0.0
      %224 = vmatpush1.msra.mxu0 %v195
      %225 = vmatprep.subr.mxu0 0.0
      %226 = vmatpush1.msra.mxu0 %v196
      %227 = vmatprep.subr.mxu0 0.0
      %228 = vmatpush1.msra.mxu0 %v197
      %229 = vmatprep.subr.mxu0 0.0
      %230 = vmatpush1.msra.mxu0 %v198
      %231 = vmatprep.subr.mxu0 0.0
      %232 = vmatpush1.msra.mxu0 %v199
      %233 = vmatprep.subr.mxu0 0.0
      %234 = vmatpush1.msra.mxu0 %v200
      %235 = vmatprep.subr.mxu0 0.0
      %236 = vmatpush1.msra.mxu0 %v201
      %237 = vmatprep.subr.mxu0 0.0
      %238 = vmatpush1.msra.mxu0 %v202
      %239 = vmatprep.subr.mxu0 0.0
      %240 = vmatpush1.msra.mxu0 %v203
      %241 = vmatprep.subr.mxu0 0.0
      %242 = vmatpush1.msra.mxu0 %v204
      %243 = vmatprep.subr.mxu0 0.0
      %244 = vmatpush1.msra.mxu0 %v205
      %245 = vmatprep.subr.mxu0 0.0
      %246 = vmatpush1.msra.mxu0 0.0
      %247 = vmatprep.subr.mxu0 0.0
      %248 = vmatpush1.msra.mxu0 0.0
      %249 = vmatprep.subr.mxu0 0.0
      %250 = vmatpush1.msra.mxu0 0.0
      %251 = vmatprep.subr.mxu0 0.0
      %252 = vmatpush1.msra.mxu0 0.0
      %253 = vmatprep.subr.mxu0 0.0
      %254 = vmatpush1.msra.mxu0 0.0
      %255 = vmatprep.subr.mxu0 0.0
      %256 = vmatpush1.msra.mxu0 0.0
      %257 = vmatprep.subr.mxu0 0.0
      %258 = vmatpush1.msra.mxu0 0.0
      %259 = vmatprep.subr.mxu0 0.0
      %260 = vmatpush1.msra.mxu0 0.0
      %261 = vmatprep.subr.mxu0 0.0
      %262 = vmatpush1.msra.mxu0 0.0
      %263 = vmatprep.subr.mxu0 0.0
      %264 = vmatpush1.msra.mxu0 0.0
      %265 = vmatprep.subr.mxu0 0.0
      %266 = vmatpush1.msra.mxu0 0.0
      %267 = vmatprep.subr.mxu0 0.0
      %268 = vmatpush1.msra.mxu0 0.0
      %269 = vmatprep.subr.mxu0 0.0
      %270 = vmatpush1.msra.mxu0 0.0
      %271 = vmatprep.subr.mxu0 0.0
      %272 = vmatpush1.msra.mxu0 0.0
      %273 = vmatprep.subr.mxu0 0.0
      %274 = vmatpush1.msra.mxu0 0.0
      %275 = vmatprep.subr.mxu0 0.0
      %276 = vmatpush1.msra.mxu0 0.0
      %277 = vmatprep.mubr.f32.mxu0 0.0
      %278 = vmatmul.mubr.f32.gmra.mrb[0].mxu0 %v174
      %v279 = vpop.f32.mrb[0].mxu0
      %v280 = vadd.f32 %v211, %v279
      %v281 = vpop.f32.mrb[0].mxu0
      %282 = vmatprep.mubr.f32.mxu0 0.0
      %283 = vmatmul.mubr.f32.gmra.mrb[0].mxu0 %v175
      %v284 = vpop.f32.mrb[0].mxu0
      %v285 = vadd.f32 %v211, %v284
      %v286 = vpop.f32.mrb[0].mxu0
      %287 = vmatprep.mubr.f32.mxu0 0.0
      %288 = vmatmul.mubr.f32.gmra.mrb[0].mxu0 %v176
      %v289 = vpop.f32.mrb[0].mxu0
      %v290 = vadd.f32 %v211, %v289
      %v291 = vpop.f32.mrb[0].mxu0
      %292 = vmatprep.mubr.f32.mxu0 0.0
      %293 = vmatmul.mubr.f32.gmra.mrb[0].mxu0 %v177
      %v294 = vpop.f32.mrb[0].mxu0
      %v295 = vadd.f32 %v211, %v294
      %v296 = vpop.f32.mrb[0].mxu0
      %297 = vmatprep.mubr.f32.mxu0 0.0
      %298 = vmatmul.mubr.f32.gmra.mrb[0].mxu0 %v178
      %v299 = vpop.f32.mrb[0].mxu0
      %v300 = vadd.f32 %v211, %v299
      %v301 = vpop.f32.mrb[0].mxu0
      %302 = vmatprep.mubr.f32.mxu0 0.0
      %303 = vmatmul.mubr.f32.gmra.mrb[0].mxu0 %v179
      %v304 = vpop.f32.mrb[0].mxu0
      %v305 = vadd.f32 %v211, %v304
      %v306 = vpop.f32.mrb[0].mxu0
      %307 = vmatprep.mubr.f32.mxu0 0.0
      %308 = vmatmul.mubr.f32.gmra.mrb[0].mxu0 %v180
      %v309 = vpop.f32.mrb[0].mxu0
      %v310 = vadd.f32 %v211, %v309
      %v311 = vpop.f32.mrb[0].mxu0
      %312 = vmatprep.mubr.f32.mxu0 0.0
      %313 = vmatmul.mubr.f32.gmra.mrb[0].mxu0 %v181
      %v314 = vpop.f32.mrb[0].mxu0
      %v315 = vadd.f32 %v211, %v314
      %v316 = vpop.f32.mrb[0].mxu0
      %317 = vmatprep.mubr.f32.mxu0 0.0
      %318 = vmatmul.mubr.f32.gmra.mrb[0].mxu0 %v182
      %v319 = vpop.f32.mrb[0].mxu0
      %v320 = vadd.f32 %v211, %v319
      %v321 = vpop.f32.mrb[0].mxu0
      %322 = vmatprep.mubr.f32.mxu0 0.0
      %323 = vmatmul.mubr.f32.gmra.mrb[0].mxu0 %v183
      %v324 = vpop.f32.mrb[0].mxu0
      %v325 = vadd.f32 %v211, %v324
      %v326 = vpop.f32.mrb[0].mxu0
      %327 = vmatprep.mubr.f32.mxu0 0.0
      %328 = vmatmul.mubr.f32.gmra.mrb[0].mxu0 %v184
      %v329 = vpop.f32.mrb[0].mxu0
      %v330 = vadd.f32 %v211, %v329
      %v331 = vpop.f32.mrb[0].mxu0
      %332 = vmatprep.mubr.f32.mxu0 0.0
      %333 = vmatmul.mubr.f32.gmra.mrb[0].mxu0 %v185
      %v334 = vpop.f32.mrb[0].mxu0
      %v335 = vadd.f32 %v211, %v334
      %v336 = vpop.f32.mrb[0].mxu0
      %337 = vmatprep.mubr.f32.mxu0 0.0
      %338 = vmatmul.mubr.f32.gmra.mrb[0].mxu0 %v186
      %v339 = vpop.f32.mrb[0].mxu0
      %v340 = vadd.f32 %v211, %v339
      %v341 = vpop.f32.mrb[0].mxu0
      %342 = vmatprep.mubr.f32.mxu0 0.0
      %343 = vmatmul.mubr.f32.gmra.mrb[0].mxu0 %v187
      %v344 = vpop.f32.mrb[0].mxu0
      %v345 = vadd.f32 %v211, %v344
      %v346 = vpop.f32.mrb[0].mxu0
      %347 = vmatprep.mubr.f32.mxu0 0.0
      %348 = vmatmul.mubr.f32.gmra.mrb[0].mxu0 %v188
      %v349 = vpop.f32.mrb[0].mxu0
      %v350 = vadd.f32 %v211, %v349
      %v351 = vpop.f32.mrb[0].mxu0
      %352 = vmatprep.mubr.f32.mxu0 0.0
      %353 = vmatmul.mubr.f32.gmra.mrb[0].mxu0 %v189
      %v354 = vpop.f32.mrb[0].mxu0
      %v355 = vadd.f32 %v211, %v354
      %v356 = vpop.f32.mrb[0].mxu0
      %357 = vdwg.mxu0
      %358 = vst [vmem:[%s172] sm:$0xff] %v280
      %359 = vst [vmem:[%s172 + $0x8] sm:$0xff] %v285
      %360 = vst [vmem:[%s172 + $0x10] sm:$0xff] %v290
      %361 = vst [vmem:[%s172 + $0x18] sm:$0xff] %v295
      %362 = vst [vmem:[%s172 + $0x20] sm:$0xff] %v300
      %363 = vst [vmem:[%s172 + $0x28] sm:$0xff] %v305
      %364 = vst [vmem:[%s172 + $0x30] sm:$0xff] %v310
      %365 = vst [vmem:[%s172 + $0x38] sm:$0xff] %v315
      %366 = vst [vmem:[%s172 + $0x40] sm:$0xff] %v320
      %367 = vst [vmem:[%s172 + $0x48] sm:$0xff] %v325
      %368 = vst [vmem:[%s172 + $0x50] sm:$0xff] %v330
      %369 = vst [vmem:[%s172 + $0x58] sm:$0xff] %v335
      %370 = vst [vmem:[%s172 + $0x60] sm:$0xff] %v340
      %371 = vst [vmem:[%s172 + $0x68] sm:$0xff] %v345
      %372 = vst [vmem:[%s172 + $0x70] sm:$0xff] %v350
      %373 = vst [vmem:[%s172 + $0x78] sm:$0xff] %v355
      %s374 = smul.u32 16, %s14
      %p375 = scmp.lt.s32.totalorder %s374, 31
      %s376 = scalar_select %p375, %s374, 31
      %s377 = smul.addr %s376, 8
      %s378 = scalar_lea.vmem %s3, %s377
      // Predicated region
      $region33: #{conv1x1_pallas.1} parent=31 // pred_check
        %p379 = pneg %p100
      $region34: #{conv1x1_pallas.1} parent=31 // pred_check_branch
        %381 = sbr.rel (%p379) target = $region36
      $region35: #{conv1x1_pallas.1} parent=31 // pred_region
        %s382 = smul.u32 16, %s14
      $region36: #{conv1x1_pallas.1} parent=31 // pred_fallthru
        _
    $region32: #{conv1x1_pallas.1} parent=5 // pred_fallthru
      _
    %p383 = scmp.le.s32.totalorder 2, %s9
    // Predicated region
    $region37: #{conv1x1_pallas.1} parent=5 // pred_check
      %p384 = pneg %p383
    $region38: #{conv1x1_pallas.1} parent=5 // pred_check_branch
      %386 = sbr.rel (%p384) target = $region40
    $region39: #{conv1x1_pallas.1} parent=5 // pred_region
      %s387 = ssub.s32 %s9, 2
      // Predicated region
      $region41: #{conv1x1_pallas.1} parent=39 // pred_check
        %p388 = pneg %p106
      $region42: #{conv1x1_pallas.1} parent=39 // pred_check_branch
        %390 = sbr.rel (%p388) target = $region44
      $region43: #{conv1x1_pallas.1} parent=39 // pred_region
        %s391 = smul.u32 16, %s15
        %p392 = scmp.lt.s32.totalorder %s391, 31
        %s393 = scalar_select %p392, %s391, 31
        %s394 = smul.addr %s393, 8
        %s395 = scalar_lea.vmem %s3, %s394
      $region44: #{conv1x1_pallas.1} parent=39 // pred_fallthru
        _
    $region40: #{conv1x1_pallas.1} parent=5 // pred_fallthru
      _
  $region6: #{conv1x1_pallas.1} parent=0 // loop_footer
    %s13 = sadd.s32 1, %s9
  $region7: #{conv1x1_pallas.1} parent=0 // loop_footer_branch
    %8 = sbr.rel target = $region3
  $region8: #{conv1x1_pallas.1} parent=0 // loop_exit
    _

</llo_original>
